<compile_context>
chip_gen: v7x
topology: tpu7x:2x2x1
jax: 0.10.0
libtpu: 0.0.40
codegen_flags: <defaults>
</compile_context>

<pallas_src>
import jax
import jax.numpy as jnp
from jax.experimental import pallas as pl
from jax.experimental.pallas import tpu as pltpu

HIDDEN = 30


def phase_dnn_kernel(x_ref, w1t_ref, w2t_ref, w3t_ref, vec_ref, o_ref):
    hidden = w2t_ref.shape[0]
    n = o_ref.shape[-1]

    x = x_ref[...]                               # (TB, Inputs); cv2 folded into w1t

    b1 = vec_ref[0:1, 0:hidden]                  # (1, 30)
    b2 = vec_ref[1:2, 0:hidden]                  # (1, 30)
    cv_sq = vec_ref[2:3, 0:n]                    # (1, N)  == cv * cv
    bias_cv = vec_ref[3:4, 0:n]                  # (1, N)  == bias * cv

    # LinLayer1/2 + sigmoid, LinLayer3 (no bias) — all on the MXU.
    h = jax.nn.sigmoid(
        jnp.dot(x, w1t_ref[...], preferred_element_type=jnp.float32) + b1)
    h = jax.nn.sigmoid(
        jnp.dot(h, w2t_ref[...], preferred_element_type=jnp.float32) + b2)
    y = jnp.dot(h, w3t_ref[...], preferred_element_type=jnp.float32)

    # softmax over the whole per-sample vector (torch dim=0) == last axis here.
    y = y - jnp.max(y, axis=-1, keepdims=True)
    e = jnp.exp(y)
    y = e / jnp.sum(e, axis=-1, keepdims=True)

    # bias_layer + Wrapping_Layers_Output, folded: (y*cv + bias)*cv
    y = y * cv_sq + bias_cv

    # NormalizationLayer twice: single relu (result is already non-negative),
    # two per-row sum-normalizations (matches the double application).
    y = jnp.maximum(y, 0.0)
    y = y * pl.reciprocal(jnp.sum(y, axis=-1, keepdims=True), approx=True)
    y = y * pl.reciprocal(jnp.sum(y, axis=-1, keepdims=True), approx=True)

    o_ref[...] = y


def simple_phase_dnn_forward(x, folded):
    """x: (Inputs,) or (B, Inputs) float32 -> (N,) or (B, N) float32."""
    squeeze = x.ndim == 1
    if squeeze:
        x = x[None, :]
    b, inputs = x.shape
    hidden, n = folded["w3t"].shape
    p = folded["vec"].shape[1]

    # Batch tile: multiple of 8 sublanes, up to 128 rows per grid step.
    tb = 128 if b >= 128 else max(8, ((b + 7) // 8) * 8)
    b_pad = ((b + tb - 1) // tb) * tb
    if b_pad != b:
        x = jnp.pad(x, ((0, b_pad - b), (0, 0)))

    out = pl.pallas_call(
        phase_dnn_kernel,
        out_shape=jax.ShapeDtypeStruct((b_pad, n), jnp.float32),
        grid=(b_pad // tb,),
        in_specs=[
            # activations: tiled along the batch axis
            pl.BlockSpec((tb, inputs), lambda i: (i, 0)),
            # weights + packed vectors: constant block index -> stay resident
            pl.BlockSpec((inputs, hidden), lambda i: (0, 0)),
            pl.BlockSpec((hidden, hidden), lambda i: (0, 0)),
            pl.BlockSpec((hidden, n), lambda i: (0, 0)),
            pl.BlockSpec((4, p), lambda i: (0, 0)),
        ],
        out_specs=pl.BlockSpec((tb, n), lambda i: (i, 0)),
        compiler_params=pltpu.CompilerParams(
            dimension_semantics=("parallel",)),
    )(x, folded["w1t"], folded["w2t"], folded["w3t"], folded["vec"])

    out = out[:b]
    if squeeze:
        out = out[0]
    return out


def make_raw_params(key, inputs):
    n = inputs // 2
    keys = jax.random.split(key, 6)

    # Connectivity_Vector: fixed (non-learned) 0/1 connectivity, deterministic.
    cv = (jnp.arange(n) % 4 != 2).astype(jnp.float32)

    def lin_w(k, out_f, in_f):
        bound = 1.0 / jnp.sqrt(in_f)
        return jax.random.uniform(k, (out_f, in_f), jnp.float32, -bound, bound)

    w1 = lin_w(keys[0], HIDDEN, inputs)
    b1 = jax.random.uniform(keys[1], (HIDDEN,), jnp.float32,
                            -1.0 / jnp.sqrt(inputs), 1.0 / jnp.sqrt(inputs))
    w2 = lin_w(keys[2], HIDDEN, HIDDEN)
    b2 = jax.random.uniform(keys[3], (HIDDEN,), jnp.float32,
                            -1.0 / jnp.sqrt(HIDDEN), 1.0 / jnp.sqrt(HIDDEN))
    w3 = lin_w(keys[4], n, HIDDEN)
    bias = jax.random.normal(keys[5], (n,), jnp.float32) * 0.05

    return dict(cv=cv, w1=w1, b1=b1, w2=w2, b2=b2, w3=w3, bias=bias)


def fold_params(raw):
    """Fold the frozen diagonal (connectivity) layers into weights, and pack
    the small vectors into one lane-major buffer (single DMA)."""
    cv = raw["cv"]
    n = cv.shape[0]
    hidden = raw["w1"].shape[0]
    cv2 = jnp.concatenate([cv, cv], axis=0)

    w1t = jnp.transpose(raw["w1"]) * cv2[:, None]   # (Inputs, 30), cv2 folded in
    w2t = jnp.transpose(raw["w2"])                  # (30, 30)
    w3t = jnp.transpose(raw["w3"])                  # (30, N)

    p = max(hidden, n)
    vec = jnp.zeros((4, p), jnp.float32)
    vec = vec.at[0, :hidden].set(raw["b1"])
    vec = vec.at[1, :hidden].set(raw["b2"])
    vec = vec.at[2, :n].set(cv * cv)                # cv_sq
    vec = vec.at[3, :n].set(raw["bias"] * cv)       # bias_cv

    return dict(w1t=w1t, w2t=w2t, w3t=w3t, vec=vec)


def reference_forward_single(x, raw):
    """Plain-JAX reference of the original (unfolded) PyTorch forward."""
    cv = raw["cv"]
    cv2 = jnp.concatenate([cv, cv], axis=0)
    hp = jax.lax.Precision.HIGHEST
    y = x * cv2
    y = jax.nn.sigmoid(jnp.dot(y, raw["w1"].T, precision=hp) + raw["b1"])
    y = jax.nn.sigmoid(jnp.dot(y, raw["w2"].T, precision=hp) + raw["b2"])
    y = jnp.dot(y, raw["w3"].T, precision=hp)
    y = jax.nn.softmax(y, axis=0)
    y = y * cv + raw["bias"]
    y = y * cv
    y = jnp.maximum(y, 0.0)
    y = y / jnp.sum(y)
    y = jnp.maximum(y, 0.0)
    y = y / jnp.sum(y)
    return y


if __name__ == "__main__":
    INPUTS = 16          # Inputs = 2 * N, N = 8
    BATCH = 128          # independent forward passes batched into the M dim

    key = jax.random.PRNGKey(0)
    k_x, k_p = jax.random.split(key)

    raw = make_raw_params(k_p, INPUTS)
    folded = fold_params(raw)
    x = jax.random.normal(k_x, (BATCH, INPUTS), jnp.float32)

    out = simple_phase_dnn_forward(x, folded)
    out = jax.block_until_ready(out)

    ref = jax.vmap(lambda r: reference_forward_single(r, raw))(x)
    assert out.shape == (BATCH, INPUTS // 2)
    assert bool(jnp.all(jnp.isfinite(out)))
    # approx=True reciprocal in the final normalizations -> modest tolerance.
    assert jnp.allclose(out, ref, atol=1e-3, rtol=1e-3), float(
        jnp.max(jnp.abs(out - ref)))

    # Single-vector path (original module semantics) also supported.
    out1 = jax.block_until_ready(simple_phase_dnn_forward(x[0], folded))
    assert out1.shape == (INPUTS // 2,)
    assert jnp.allclose(out1, ref[0], atol=1e-3, rtol=1e-3)

    print("KERNEL_OK")
</pallas_src>

<mosaic_0001>
module attributes {stable_mosaic.version = 11 : i64} {
  func.func @phase_dnn_kernel(%arg0: i32, %arg1: memref<128x16xf32, #tpu.memory_space<vmem>>, %arg2: memref<16x30xf32, #tpu.memory_space<vmem>>, %arg3: memref<30x30xf32, #tpu.memory_space<vmem>>, %arg4: memref<30x8xf32, #tpu.memory_space<vmem>>, %arg5: memref<4x30xf32, #tpu.memory_space<vmem>>, %arg6: memref<128x8xf32, #tpu.memory_space<vmem>>) attributes {dimension_semantics = [#tpu.dimension_semantics<parallel>], iteration_bounds = array<i64: 1>, scalar_prefetch = 0 : i64, scratch_operands = 0 : i64, tpu.core_type = #tpu.core_type<tc>, window_params = [{transform_indices = @transform_0, window_bounds = array<i64: 128, 16>}, {pipeline_mode = #tpu.pipeline_mode<synchronous>, transform_indices = @transform_1, window_bounds = array<i64: 16, 30>}, {pipeline_mode = #tpu.pipeline_mode<synchronous>, transform_indices = @transform_2, window_bounds = array<i64: 30, 30>}, {pipeline_mode = #tpu.pipeline_mode<synchronous>, transform_indices = @transform_3, window_bounds = array<i64: 30, 8>}, {pipeline_mode = #tpu.pipeline_mode<synchronous>, transform_indices = @transform_4, window_bounds = array<i64: 4, 30>}, {transform_indices = @transform_5, window_bounds = array<i64: 128, 8>}]} {
    %c0 = arith.constant 0 : index
    %c0_0 = arith.constant 0 : index
    %0 = vector.load %arg1[%c0, %c0_0] : memref<128x16xf32, #tpu.memory_space<vmem>>, vector<128x16xf32>
    %c0_1 = arith.constant 0 : index
    %c0_2 = arith.constant 0 : index
    %1 = vector.load %arg5[%c0_1, %c0_2] : memref<4x30xf32, #tpu.memory_space<vmem>>, vector<1x30xf32>
    %c1 = arith.constant 1 : index
    %c0_3 = arith.constant 0 : index
    %2 = vector.load %arg5[%c1, %c0_3] : memref<4x30xf32, #tpu.memory_space<vmem>>, vector<1x30xf32>
    %c2 = arith.constant 2 : index
    %c0_4 = arith.constant 0 : index
    %3 = vector.load %arg5[%c2, %c0_4] : memref<4x30xf32, #tpu.memory_space<vmem>>, vector<1x8xf32>
    %c3 = arith.constant 3 : index
    %c0_5 = arith.constant 0 : index
    %4 = vector.load %arg5[%c3, %c0_5] : memref<4x30xf32, #tpu.memory_space<vmem>>, vector<1x8xf32>
    %c0_6 = arith.constant 0 : index
    %c0_7 = arith.constant 0 : index
    %5 = vector.load %arg2[%c0_6, %c0_7] : memref<16x30xf32, #tpu.memory_space<vmem>>, vector<16x30xf32>
    %cst = arith.constant dense<0.000000e+00> : vector<128x30xf32>
    %6 = tpu.matmul %0, %5, %cst {dimension_numbers = #tpu.dot_dimension_numbers<[1], [0], [0], [1], [0, 0, 1, 1], [], []>} : vector<128x16xf32>, vector<16x30xf32>, vector<128x30xf32> -> vector<128x30xf32>
    %7 = vector.broadcast %1 : vector<1x30xf32> to vector<128x30xf32>
    %8 = arith.addf %6, %7 : vector<128x30xf32>
    %9 = arith.negf %8 : vector<128x30xf32>
    %10 = math.exp %9 : vector<128x30xf32>
    %cst_8 = arith.constant 1.000000e+00 : f32
    %11 = vector.broadcast %cst_8 : f32 to vector<128x30xf32>
    %12 = arith.addf %11, %10 : vector<128x30xf32>
    %13 = arith.divf %11, %12 : vector<128x30xf32>
    %c0_9 = arith.constant 0 : index
    %c0_10 = arith.constant 0 : index
    %14 = vector.load %arg3[%c0_9, %c0_10] : memref<30x30xf32, #tpu.memory_space<vmem>>, vector<30x30xf32>
    %cst_11 = arith.constant dense<0.000000e+00> : vector<128x30xf32>
    %15 = tpu.matmul %13, %14, %cst_11 {dimension_numbers = #tpu.dot_dimension_numbers<[1], [0], [0], [1], [0, 0, 1, 1], [], []>} : vector<128x30xf32>, vector<30x30xf32>, vector<128x30xf32> -> vector<128x30xf32>
    %16 = vector.broadcast %2 : vector<1x30xf32> to vector<128x30xf32>
    %17 = arith.addf %15, %16 : vector<128x30xf32>
    %18 = arith.negf %17 : vector<128x30xf32>
    %19 = math.exp %18 : vector<128x30xf32>
    %cst_12 = arith.constant 1.000000e+00 : f32
    %20 = vector.broadcast %cst_12 : f32 to vector<128x30xf32>
    %21 = arith.addf %20, %19 : vector<128x30xf32>
    %22 = arith.divf %20, %21 : vector<128x30xf32>
    %c0_13 = arith.constant 0 : index
    %c0_14 = arith.constant 0 : index
    %23 = vector.load %arg4[%c0_13, %c0_14] : memref<30x8xf32, #tpu.memory_space<vmem>>, vector<30x8xf32>
    %cst_15 = arith.constant dense<0.000000e+00> : vector<128x8xf32>
    %24 = tpu.matmul %22, %23, %cst_15 {dimension_numbers = #tpu.dot_dimension_numbers<[1], [0], [0], [1], [0, 0, 1, 1], [], []>} : vector<128x30xf32>, vector<30x8xf32>, vector<128x8xf32> -> vector<128x8xf32>
    %cst_16 = arith.constant dense<0xFF800000> : vector<128xf32>
    %25 = vector.multi_reduction <maximumf>, %24, %cst_16 [1] : vector<128x8xf32> to vector<128xf32>
    %26 = vector.shape_cast %25 : vector<128xf32> to vector<128x1xf32>
    %27 = vector.broadcast %26 : vector<128x1xf32> to vector<128x8xf32>
    %28 = arith.subf %24, %27 : vector<128x8xf32>
    %29 = math.exp %28 : vector<128x8xf32>
    %cst_17 = arith.constant dense<0.000000e+00> : vector<128xf32>
    %30 = vector.multi_reduction <add>, %29, %cst_17 [1] : vector<128x8xf32> to vector<128xf32>
    %31 = vector.shape_cast %30 : vector<128xf32> to vector<128x1xf32>
    %32 = vector.broadcast %31 : vector<128x1xf32> to vector<128x8xf32>
    %33 = arith.divf %29, %32 : vector<128x8xf32>
    %34 = vector.broadcast %3 : vector<1x8xf32> to vector<128x8xf32>
    %35 = arith.mulf %33, %34 : vector<128x8xf32>
    %36 = vector.broadcast %4 : vector<1x8xf32> to vector<128x8xf32>
    %37 = arith.addf %35, %36 : vector<128x8xf32>
    %cst_18 = arith.constant 0.000000e+00 : f32
    %38 = vector.broadcast %cst_18 : f32 to vector<128x8xf32>
    %39 = arith.maximumf %37, %38 : vector<128x8xf32>
    %cst_19 = arith.constant dense<0.000000e+00> : vector<128xf32>
    %40 = vector.multi_reduction <add>, %39, %cst_19 [1] : vector<128x8xf32> to vector<128xf32>
    %41 = vector.shape_cast %40 : vector<128xf32> to vector<128x1xf32>
    %42 = tpu.reciprocal %41 {approx = true} : vector<128x1xf32> -> vector<128x1xf32>
    %43 = vector.broadcast %42 : vector<128x1xf32> to vector<128x8xf32>
    %44 = arith.mulf %39, %43 : vector<128x8xf32>
    %cst_20 = arith.constant dense<0.000000e+00> : vector<128xf32>
    %45 = vector.multi_reduction <add>, %44, %cst_20 [1] : vector<128x8xf32> to vector<128xf32>
    %46 = vector.shape_cast %45 : vector<128xf32> to vector<128x1xf32>
    %47 = tpu.reciprocal %46 {approx = true} : vector<128x1xf32> -> vector<128x1xf32>
    %48 = vector.broadcast %47 : vector<128x1xf32> to vector<128x8xf32>
    %49 = arith.mulf %44, %48 : vector<128x8xf32>
    %c0_21 = arith.constant 0 : index
    %c0_22 = arith.constant 0 : index
    %50 = vector.load %arg6[%c0_21, %c0_22] : memref<128x8xf32, #tpu.memory_space<vmem>>, vector<128x8xf32>
    tpu.vector_store %arg6[%c0_21, %c0_22], %49 {strides = array<i32>} : memref<128x8xf32, #tpu.memory_space<vmem>>, vector<128x8xf32>,
    return
  }
  func.func @transform_0(%arg0: i32) -> (i32, i32) {
    %c0_i32 = arith.constant 0 : i32
    %c0_i32_0 = arith.constant 0 : i32
    return %arg0, %c0_i32 : i32, i32
  }
  func.func @transform_1(%arg0: i32) -> (i32, i32) {
    %c0_i32 = arith.constant 0 : i32
    %c0_i32_0 = arith.constant 0 : i32
    %c0_i32_1 = arith.constant 0 : i32
    return %c0_i32, %c0_i32_0 : i32, i32
  }
  func.func @transform_2(%arg0: i32) -> (i32, i32) {
    %c0_i32 = arith.constant 0 : i32
    %c0_i32_0 = arith.constant 0 : i32
    %c0_i32_1 = arith.constant 0 : i32
    return %c0_i32, %c0_i32_0 : i32, i32
  }
  func.func @transform_3(%arg0: i32) -> (i32, i32) {
    %c0_i32 = arith.constant 0 : i32
    %c0_i32_0 = arith.constant 0 : i32
    %c0_i32_1 = arith.constant 0 : i32
    return %c0_i32, %c0_i32_0 : i32, i32
  }
  func.func @transform_4(%arg0: i32) -> (i32, i32) {
    %c0_i32 = arith.constant 0 : i32
    %c0_i32_0 = arith.constant 0 : i32
    %c0_i32_1 = arith.constant 0 : i32
    return %c0_i32, %c0_i32_0 : i32, i32
  }
  func.func @transform_5(%arg0: i32) -> (i32, i32) {
    %c0_i32 = arith.constant 0 : i32
    %c0_i32_0 = arith.constant 0 : i32
    return %arg0, %c0_i32 : i32, i32
  }
}

</mosaic_0001>

<llo_original>
// kernel: tpu_custom_call.1
$region0: #{tpu_custom_call.1}
  #allocation0 [shape = 'u32[]', space=smem, size = 0x4, offset = 0x4, fixed_abs, tag = 'smem constant byte address 0x4 - core index']
  #allocation1 [shape = 'u32[144,128]{1,0:T(1,128)}', space=vmem, size = 0x12000, scoped, tag = 'internal scratch']
  %s0 = inlined_call_operand.vmem [shape: f32[128,16], index: 0, kind: input, shape index: {}]
  %s1 = inlined_call_operand.vmem [shape: f32[16,30], index: 1, kind: input, shape index: {}]
  %s2 = inlined_call_operand.vmem [shape: f32[30,30], index: 2, kind: input, shape index: {}]
  %s3 = inlined_call_operand.vmem [shape: f32[30,8], index: 3, kind: input, shape index: {}]
  %s4 = inlined_call_operand.vmem [shape: f32[4,30], index: 4, kind: input, shape index: {}]
  %s5 = inlined_call_operand.vmem [shape: f32[128,8], index: 5, kind: output, shape index: {}]
  %s6 = sld [smem:[#allocation0]]
  $region30: #{tpu_custom_call.1} parent=0
    _
  %s8 = ssub.s32 1, %s6
  %s9 = scalar_select 0, %s8, %s6
  // Predicated region
  $region2: #{tpu_custom_call.1} parent=0 // pred_check
    _
  $region3: #{tpu_custom_call.1} parent=0 // pred_check_branch
    %11 = sbr.rel (0) target = $region5
  $region4: #{tpu_custom_call.1} parent=0 // pred_region
    _
  $region5: #{tpu_custom_call.1} parent=0 // pred_fallthru
    _
  // Predicated region
  $region6: #{tpu_custom_call.1} parent=0 // pred_check
    _
  $region7: #{tpu_custom_call.1} parent=0 // pred_check_branch
    %13 = sbr.rel (0) target = $region9
  $region8: #{tpu_custom_call.1} parent=0 // pred_region
    _
  $region9: #{tpu_custom_call.1} parent=0 // pred_fallthru
    _
  // Predicated region
  $region10: #{tpu_custom_call.1} parent=0 // pred_check
    _
  $region11: #{tpu_custom_call.1} parent=0 // pred_check_branch
    %15 = sbr.rel (0) target = $region13
  $region12: #{tpu_custom_call.1} parent=0 // pred_region
    _
  $region13: #{tpu_custom_call.1} parent=0 // pred_fallthru
    _
  // Predicated region
  $region14: #{tpu_custom_call.1} parent=0 // pred_check
    _
  $region15: #{tpu_custom_call.1} parent=0 // pred_check_branch
    %17 = sbr.rel (0) target = $region17
  $region16: #{tpu_custom_call.1} parent=0 // pred_region
    _
  $region17: #{tpu_custom_call.1} parent=0 // pred_fallthru
    _
  // Predicated region
  $region18: #{tpu_custom_call.1} parent=0 // pred_check
    _
  $region19: #{tpu_custom_call.1} parent=0 // pred_check_branch
    %19 = sbr.rel (0) target = $region21
  $region20: #{tpu_custom_call.1} parent=0 // pred_region
    _
  $region21: #{tpu_custom_call.1} parent=0 // pred_fallthru
    _
  %v20 = vld [vmem:[%s0] sm:$0xff]
  %v21 = vld [vmem:[%s0 + $0x8] sm:$0xff]
  %v22 = vld [vmem:[%s0 + $0x10] sm:$0xff]
  %v23 = vld [vmem:[%s0 + $0x18] sm:$0xff]
  %v24 = vld [vmem:[%s0 + $0x20] sm:$0xff]
  %v25 = vld [vmem:[%s0 + $0x28] sm:$0xff]
  %v26 = vld [vmem:[%s0 + $0x30] sm:$0xff]
  %v27 = vld [vmem:[%s0 + $0x38] sm:$0xff]
  %v28 = vld [vmem:[%s0 + $0x40] sm:$0xff]
  %v29 = vld [vmem:[%s0 + $0x48] sm:$0xff]
  %v30 = vld [vmem:[%s0 + $0x50] sm:$0xff]
  %v31 = vld [vmem:[%s0 + $0x58] sm:$0xff]
  %v32 = vld [vmem:[%s0 + $0x60] sm:$0xff]
  %v33 = vld [vmem:[%s0 + $0x68] sm:$0xff]
  %v34 = vld [vmem:[%s0 + $0x70] sm:$0xff]
  %v35 = vld [vmem:[%s0 + $0x78] sm:$0xff]
  %v36 = vld [vmem:[%s4] sm:$0x1]
  %v37 = vld [vmem:[%s4 + $0x1] sm:$0x1]
  %v38 = vld [vmem:[%s4 + $0x2] sm:$0x1]
  %v39 = vld [vmem:[%s4 + $0x3] sm:$0x1]
  %v40 = vld [vmem:[%s1] sm:$0xff]
  %v41 = vld [vmem:[%s1 + $0x8] sm:$0xff]
  %v42 = vlaneseq
  %v43 = vshrl.u32 %v42, 7
  %v44 = vsub.s32 0, %v43
  %v45 = vrot.slane %v36, %v44
  %vm46 = vcmask 130048
  %v48 = vsel %vm46, %v20, 0
  %v51 = vsel %vm46, %v21, 0
  %v54 = vsel %vm46, %v22, 0
  %v57 = vsel %vm46, %v23, 0
  %v60 = vsel %vm46, %v24, 0
  %v63 = vsel %vm46, %v25, 0
  %v66 = vsel %vm46, %v26, 0
  %v69 = vsel %vm46, %v27, 0
  %v72 = vsel %vm46, %v28, 0
  %v75 = vsel %vm46, %v29, 0
  %v78 = vsel %vm46, %v30, 0
  %v81 = vsel %vm46, %v31, 0
  %v84 = vsel %vm46, %v32, 0
  %v87 = vsel %vm46, %v33, 0
  %v90 = vsel %vm46, %v34, 0
  %v93 = vsel %vm46, %v35, 0
  %95 = vmatprep.subr.mxu0 0.0
  %96 = vmatpush1.msra.mxu0 %v40
  %97 = vmatprep.subr.mxu0 0.0
  %98 = vmatpush1.msra.mxu0 %v41
  %99 = vmatprep.subr.mxu0 0.0
  %100 = vmatpush1.msra.mxu0 0.0
  %101 = vmatprep.subr.mxu0 0.0
  %102 = vmatpush1.msra.mxu0 0.0
  %103 = vmatprep.subr.mxu0 0.0
  %104 = vmatpush1.msra.mxu0 0.0
  %105 = vmatprep.subr.mxu0 0.0
  %106 = vmatpush1.msra.mxu0 0.0
  %107 = vmatprep.subr.mxu0 0.0
  %108 = vmatpush1.msra.mxu0 0.0
  %109 = vmatprep.subr.mxu0 0.0
  %110 = vmatpush1.msra.mxu0 0.0
  %111 = vmatprep.subr.mxu0 0.0
  %112 = vmatpush1.msra.mxu0 0.0
  %113 = vmatprep.subr.mxu0 0.0
  %114 = vmatpush1.msra.mxu0 0.0
  %115 = vmatprep.subr.mxu0 0.0
  %116 = vmatpush1.msra.mxu0 0.0
  %117 = vmatprep.subr.mxu0 0.0
  %118 = vmatpush1.msra.mxu0 0.0
  %119 = vmatprep.subr.mxu0 0.0
  %120 = vmatpush1.msra.mxu0 0.0
  %121 = vmatprep.subr.mxu0 0.0
  %122 = vmatpush1.msra.mxu0 0.0
  %123 = vmatprep.subr.mxu0 0.0
  %124 = vmatpush1.msra.mxu0 0.0
  %125 = vmatprep.subr.mxu0 0.0
  %126 = vmatpush1.msra.mxu0 0.0
  %127 = vmatprep.subr.mxu0 0.0
  %128 = vmatpush1.msra.mxu0 0.0
  %129 = vmatprep.subr.mxu0 0.0
  %130 = vmatpush1.msra.mxu0 0.0
  %131 = vmatprep.subr.mxu0 0.0
  %132 = vmatpush1.msra.mxu0 0.0
  %133 = vmatprep.subr.mxu0 0.0
  %134 = vmatpush1.msra.mxu0 0.0
  %135 = vmatprep.subr.mxu0 0.0
  %136 = vmatpush1.msra.mxu0 0.0
  %137 = vmatprep.subr.mxu0 0.0
  %138 = vmatpush1.msra.mxu0 0.0
  %139 = vmatprep.subr.mxu0 0.0
  %140 = vmatpush1.msra.mxu0 0.0
  %141 = vmatprep.subr.mxu0 0.0
  %142 = vmatpush1.msra.mxu0 0.0
  %143 = vmatprep.subr.mxu0 0.0
  %144 = vmatpush1.msra.mxu0 0.0
  %145 = vmatprep.subr.mxu0 0.0
  %146 = vmatpush1.msra.mxu0 0.0
  %147 = vmatprep.subr.mxu0 0.0
  %148 = vmatpush1.msra.mxu0 0.0
  %149 = vmatprep.subr.mxu0 0.0
  %150 = vmatpush1.msra.mxu0 0.0
  %151 = vmatprep.subr.mxu0 0.0
  %152 = vmatpush1.msra.mxu0 0.0
  %153 = vmatprep.subr.mxu0 0.0
  %154 = vmatpush1.msra.mxu0 0.0
  %155 = vmatprep.subr.mxu0 0.0
  %156 = vmatpush1.msra.mxu0 0.0
  %157 = vmatprep.subr.mxu0 0.0
  %158 = vmatpush1.msra.mxu0 0.0
  %159 = vmatprep.mubr.f32.mxu0 0.0
  %160 = vmatmul.mubr.f32.gmra.mrb[0].mxu0 %v48
  %v161 = vpop.f32.mrb[0].mxu0
  %v162 = vadd.f32 %v45, %v161
  %v163 = vpop.f32.mrb[0].mxu0
  %164 = vmatprep.mubr.f32.mxu0 0.0
  %165 = vmatmul.mubr.f32.gmra.mrb[0].mxu0 %v51
  %v166 = vpop.f32.mrb[0].mxu0
  %v167 = vadd.f32 %v45, %v166
  %v168 = vpop.f32.mrb[0].mxu0
  %169 = vmatprep.mubr.f32.mxu0 0.0
  %170 = vmatmul.mubr.f32.gmra.mrb[0].mxu0 %v54
  %v171 = vpop.f32.mrb[0].mxu0
  %v172 = vadd.f32 %v45, %v171
  %v173 = vpop.f32.mrb[0].mxu0
  %174 = vmatprep.mubr.f32.mxu0 0.0
  %175 = vmatmul.mubr.f32.gmra.mrb[0].mxu0 %v57
  %v176 = vpop.f32.mrb[0].mxu0
  %v177 = vadd.f32 %v45, %v176
  %v178 = vpop.f32.mrb[0].mxu0
  %179 = vmatprep.mubr.f32.mxu0 0.0
  %180 = vmatmul.mubr.f32.gmra.mrb[0].mxu0 %v60
  %v181 = vpop.f32.mrb[0].mxu0
  %v182 = vadd.f32 %v45, %v181
  %v183 = vpop.f32.mrb[0].mxu0
  %184 = vmatprep.mubr.f32.mxu0 0.0
  %185 = vmatmul.mubr.f32.gmra.mrb[0].mxu0 %v63
  %v186 = vpop.f32.mrb[0].mxu0
  %v187 = vadd.f32 %v45, %v186
  %v188 = vpop.f32.mrb[0].mxu0
  %189 = vmatprep.mubr.f32.mxu0 0.0
  %190 = vmatmul.mubr.f32.gmra.mrb[0].mxu0 %v66
  %v191 = vpop.f32.mrb[0].mxu0
  %v192 = vadd.f32 %v45, %v191
  %v193 = vpop.f32.mrb[0].mxu0
  %194 = vmatprep.mubr.f32.mxu0 0.0
  %195 = vmatmul.mubr.f32.gmra.mrb[0].mxu0 %v69
  %v196 = vpop.f32.mrb[0].mxu0
  %v197 = vadd.f32 %v45, %v196
  %v198 = vpop.f32.mrb[0].mxu0
  %199 = vmatprep.mubr.f32.mxu0 0.0
  %200 = vmatmul.mubr.f32.gmra.mrb[0].mxu0 %v72
  %v201 = vpop.f32.mrb[0].mxu0
  %v202 = vadd.f32 %v45, %v201
  %v203 = vpop.f32.mrb[0].mxu0
  %204 = vmatprep.mubr.f32.mxu0 0.0
  %205 = vmatmul.mubr.f32.gmra.mrb[0].mxu0 %v75
  %v206 = vpop.f32.mrb[0].mxu0
  %v207 = vadd.f32 %v45, %v206
  %v208 = vpop.f32.mrb[0].mxu0
  %209 = vmatprep.mubr.f32.mxu0 0.0
  %210 = vmatmul.mubr.f32.gmra.mrb[0].mxu0 %v78
  %v211 = vpop.f32.mrb[0].mxu0
  %v212 = vadd.f32 %v45, %v211
  %v213 = vpop.f32.mrb[0].mxu0
  %214 = vmatprep.mubr.f32.mxu0 0.0
  %215 = vmatmul.mubr.f32.gmra.mrb[0].mxu0 %v81
  %v216 = vpop.f32.mrb[0].mxu0
  %v217 = vadd.f32 %v45, %v216
  %v218 = vpop.f32.mrb[0].mxu0
  %219 = vmatprep.mubr.f32.mxu0 0.0
  %220 = vmatmul.mubr.f32.gmra.mrb[0].mxu0 %v84
  %v221 = vpop.f32.mrb[0].mxu0
  %v222 = vadd.f32 %v45, %v221
  %v223 = vpop.f32.mrb[0].mxu0
  %224 = vmatprep.mubr.f32.mxu0 0.0
  %225 = vmatmul.mubr.f32.gmra.mrb[0].mxu0 %v87
  %v226 = vpop.f32.mrb[0].mxu0
  %v227 = vadd.f32 %v45, %v226
  %v228 = vpop.f32.mrb[0].mxu0
  %229 = vmatprep.mubr.f32.mxu0 0.0
  %230 = vmatmul.mubr.f32.gmra.mrb[0].mxu0 %v90
  %v231 = vpop.f32.mrb[0].mxu0
  %v232 = vadd.f32 %v45, %v231
  %v233 = vpop.f32.mrb[0].mxu0
  %234 = vmatprep.mubr.f32.mxu0 0.0
  %235 = vmatmul.mubr.f32.gmra.mrb[0].mxu0 %v93
  %v236 = vpop.f32.mrb[0].mxu0
  %v237 = vadd.f32 %v45, %v236
  %v238 = vpop.f32.mrb[0].mxu0
  %239 = vdwg.mxu0
  %v240 = vxor.u32 %v162, 2147483648
  %v241 = vxor.u32 %v167, 2147483648
  %v242 = vxor.u32 %v172, 2147483648
  %v243 = vxor.u32 %v177, 2147483648
  %v244 = vxor.u32 %v182, 2147483648
  %v245 = vxor.u32 %v187, 2147483648
  %v246 = vxor.u32 %v192, 2147483648
  %v247 = vxor.u32 %v197, 2147483648
  %v248 = vxor.u32 %v202, 2147483648
  %v249 = vxor.u32 %v207, 2147483648
  %v250 = vxor.u32 %v212, 2147483648
  %v251 = vxor.u32 %v217, 2147483648
  %v252 = vxor.u32 %v222, 2147483648
  %v253 = vxor.u32 %v227, 2147483648
  %v254 = vxor.u32 %v232, 2147483648
  %v255 = vxor.u32 %v237, 2147483648
  %v256 = vmul.f32 %v240, 1.442695
  %v257 = vpow.pop %v256
  %v258 = vmul.f32 %v241, 1.442695
  %v259 = vpow.pop %v258
  %v260 = vmul.f32 %v242, 1.442695
  %v261 = vpow.pop %v260
  %v262 = vmul.f32 %v243, 1.442695
  %v263 = vpow.pop %v262
  %v264 = vmul.f32 %v244, 1.442695
  %v265 = vpow.pop %v264
  %v266 = vmul.f32 %v245, 1.442695
  %v267 = vpow.pop %v266
  %v268 = vmul.f32 %v246, 1.442695
  %v269 = vpow.pop %v268
  %v270 = vmul.f32 %v247, 1.442695
  %v271 = vpow.pop %v270
  %v272 = vmul.f32 %v248, 1.442695
  %v273 = vpow.pop %v272
  %v274 = vmul.f32 %v249, 1.442695
  %v275 = vpow.pop %v274
  %v276 = vmul.f32 %v250, 1.442695
  %v277 = vpow.pop %v276
  %v278 = vmul.f32 %v251, 1.442695
  %v279 = vpow.pop %v278
  %v280 = vmul.f32 %v252, 1.442695
  %v281 = vpow.pop %v280
  %v282 = vmul.f32 %v253, 1.442695
  %v283 = vpow.pop %v282
  %v284 = vmul.f32 %v254, 1.442695
  %v285 = vpow.pop %v284
  %v286 = vmul.f32 %v255, 1.442695
  %v287 = vpow.pop %v286
  %v288 = vadd.f32 %v257, 1.0
  %v289 = vadd.f32 %v259, 1.0
  %v290 = vadd.f32 %v261, 1.0
  %v291 = vadd.f32 %v263, 1.0
  %v292 = vadd.f32 %v265, 1.0
  %v293 = vadd.f32 %v267, 1.0
  %v294 = vadd.f32 %v269, 1.0
  %v295 = vadd.f32 %v271, 1.0
  %v296 = vadd.f32 %v273, 1.0
  %v297 = vadd.f32 %v275, 1.0
  %v298 = vadd.f32 %v277, 1.0
  %v299 = vadd.f32 %v279, 1.0
  %v300 = vadd.f32 %v281, 1.0
  %v301 = vadd.f32 %v283, 1.0
  %v302 = vadd.f32 %v285, 1.0
  %v303 = vadd.f32 %v287, 1.0
  %v304 = vrcp.pop %v288
  %v305 = vmul.f32 1.0, %v304
  %v306 = vrcp.pop %v289
  %v307 = vmul.f32 1.0, %v306
  %v308 = vrcp.pop %v290
  %v309 = vmul.f32 1.0, %v308
  %v310 = vrcp.pop %v291
  %v311 = vmul.f32 1.0, %v310
  %v312 = vrcp.pop %v292
  %v313 = vmul.f32 1.0, %v312
  %v314 = vrcp.pop %v293
  %v315 = vmul.f32 1.0, %v314
  %v316 = vrcp.pop %v294
  %v317 = vmul.f32 1.0, %v316
  %v318 = vrcp.pop %v295
  %v319 = vmul.f32 1.0, %v318
  %v320 = vrcp.pop %v296
  %v321 = vmul.f32 1.0, %v320
  %v322 = vrcp.pop %v297
  %v323 = vmul.f32 1.0, %v322
  %v324 = vrcp.pop %v298
  %v325 = vmul.f32 1.0, %v324
  %v326 = vrcp.pop %v299
  %v327 = vmul.f32 1.0, %v326
  %v328 = vrcp.pop %v300
  %v329 = vmul.f32 1.0, %v328
  %v330 = vrcp.pop %v301
  %v331 = vmul.f32 1.0, %v330
  %v332 = vrcp.pop %v302
  %v333 = vmul.f32 1.0, %v332
  %v334 = vrcp.pop %v303
  %v335 = vmul.f32 1.0, %v334
  %v336 = vld [vmem:[%s2] sm:$0xff]
  %v337 = vld [vmem:[%s2 + $0x8] sm:$0xff]
  %v338 = vld [vmem:[%s2 + $0x10] sm:$0xff]
  %v339 = vld [vmem:[%s2 + $0x18] sm:$0x3f]
  %v340 = vlaneseq
  %v341 = vshrl.u32 %v340, 7
  %v342 = vsub.s32 0, %v341
  %v343 = vrot.slane %v37, %v342
  %vm344 = vcmask 244736
  %v346 = vsel %vm344, %v305, 0
  %v349 = vsel %vm344, %v307, 0
  %v352 = vsel %vm344, %v309, 0
  %v355 = vsel %vm344, %v311, 0
  %v358 = vsel %vm344, %v313, 0
  %v361 = vsel %vm344, %v315, 0
  %v364 = vsel %vm344, %v317, 0
  %v367 = vsel %vm344, %v319, 0
  %v370 = vsel %vm344, %v321, 0
  %v373 = vsel %vm344, %v323, 0
  %v376 = vsel %vm344, %v325, 0
  %v379 = vsel %vm344, %v327, 0
  %v382 = vsel %vm344, %v329, 0
  %v385 = vsel %vm344, %v331, 0
  %v388 = vsel %vm344, %v333, 0
  %v391 = vsel %vm344, %v335, 0
  %vm393 = vcmask 1045504
  %v395 = vsel %vm393, %v339, 0
  %397 = vmatprep.subr.mxu0 0.0
  %398 = vmatpush1.msra.mxu0 %v336
  %399 = vmatprep.subr.mxu0 0.0
  %400 = vmatpush1.msra.mxu0 %v337
  %401 = vmatprep.subr.mxu0 0.0
  %402 = vmatpush1.msra.mxu0 %v338
  %403 = vmatprep.subr.mxu0 0.0
  %404 = vmatpush1.msra.mxu0 %v395
  %405 = vmatprep.subr.mxu0 0.0
  %406 = vmatpush1.msra.mxu0 0.0
  %407 = vmatprep.subr.mxu0 0.0
  %408 = vmatpush1.msra.mxu0 0.0
  %409 = vmatprep.subr.mxu0 0.0
  %410 = vmatpush1.msra.mxu0 0.0
  %411 = vmatprep.subr.mxu0 0.0
  %412 = vmatpush1.msra.mxu0 0.0
  %413 = vmatprep.subr.mxu0 0.0
  %414 = vmatpush1.msra.mxu0 0.0
  %415 = vmatprep.subr.mxu0 0.0
  %416 = vmatpush1.msra.mxu0 0.0
  %417 = vmatprep.subr.mxu0 0.0
  %418 = vmatpush1.msra.mxu0 0.0
  %419 = vmatprep.subr.mxu0 0.0
  %420 = vmatpush1.msra.mxu0 0.0
  %421 = vmatprep.subr.mxu0 0.0
  %422 = vmatpush1.msra.mxu0 0.0
  %423 = vmatprep.subr.mxu0 0.0
  %424 = vmatpush1.msra.mxu0 0.0
  %425 = vmatprep.subr.mxu0 0.0
  %426 = vmatpush1.msra.mxu0 0.0
  %427 = vmatprep.subr.mxu0 0.0
  %428 = vmatpush1.msra.mxu0 0.0
  %429 = vmatprep.subr.mxu0 0.0
  %430 = vmatpush1.msra.mxu0 0.0
  %431 = vmatprep.subr.mxu0 0.0
  %432 = vmatpush1.msra.mxu0 0.0
  %433 = vmatprep.subr.mxu0 0.0
  %434 = vmatpush1.msra.mxu0 0.0
  %435 = vmatprep.subr.mxu0 0.0
  %436 = vmatpush1.msra.mxu0 0.0
  %437 = vmatprep.subr.mxu0 0.0
  %438 = vmatpush1.msra.mxu0 0.0
  %439 = vmatprep.subr.mxu0 0.0
  %440 = vmatpush1.msra.mxu0 0.0
  %441 = vmatprep.subr.mxu0 0.0
  %442 = vmatpush1.msra.mxu0 0.0
  %443 = vmatprep.subr.mxu0 0.0
  %444 = vmatpush1.msra.mxu0 0.0
  %445 = vmatprep.subr.mxu0 0.0
  %446 = vmatpush1.msra.mxu0 0.0
  %447 = vmatprep.subr.mxu0 0.0
  %448 = vmatpush1.msra.mxu0 0.0
  %449 = vmatprep.subr.mxu0 0.0
  %450 = vmatpush1.msra.mxu0 0.0
  %451 = vmatprep.subr.mxu0 0.0
  %452 = vmatpush1.msra.mxu0 0.0
  %453 = vmatprep.subr.mxu0 0.0
  %454 = vmatpush1.msra.mxu0 0.0
  %455 = vmatprep.subr.mxu0 0.0
  %456 = vmatpush1.msra.mxu0 0.0
  %457 = vmatprep.subr.mxu0 0.0
  %458 = vmatpush1.msra.mxu0 0.0
  %459 = vmatprep.subr.mxu0 0.0
  %460 = vmatpush1.msra.mxu0 0.0
  %461 = vmatprep.mubr.f32.mxu0 0.0
  %462 = vmatmul.mubr.f32.gmra.mrb[0].mxu0 %v346
  %v463 = vpop.f32.mrb[0].mxu0
  %v464 = vadd.f32 %v343, %v463
  %v465 = vpop.f32.mrb[0].mxu0
  %466 = vmatprep.mubr.f32.mxu0 0.0
  %467 = vmatmul.mubr.f32.gmra.mrb[0].mxu0 %v349
  %v468 = vpop.f32.mrb[0].mxu0
  %v469 = vadd.f32 %v343, %v468
  %v470 = vpop.f32.mrb[0].mxu0
  %471 = vmatprep.mubr.f32.mxu0 0.0
  %472 = vmatmul.mubr.f32.gmra.mrb[0].mxu0 %v352
  %v473 = vpop.f32.mrb[0].mxu0
  %v474 = vadd.f32 %v343, %v473
  %v475 = vpop.f32.mrb[0].mxu0
  %476 = vmatprep.mubr.f32.mxu0 0.0
  %477 = vmatmul.mubr.f32.gmra.mrb[0].mxu0 %v355
  %v478 = vpop.f32.mrb[0].mxu0
  %v479 = vadd.f32 %v343, %v478
  %v480 = vpop.f32.mrb[0].mxu0
  %481 = vmatprep.mubr.f32.mxu0 0.0
  %482 = vmatmul.mubr.f32.gmra.mrb[0].mxu0 %v358
  %v483 = vpop.f32.mrb[0].mxu0
  %v484 = vadd.f32 %v343, %v483
  %v485 = vpop.f32.mrb[0].mxu0
  %486 = vmatprep.mubr.f32.mxu0 0.0
  %487 = vmatmul.mubr.f32.gmra.mrb[0].mxu0 %v361
  %v488 = vpop.f32.mrb[0].mxu0
  %v489 = vadd.f32 %v343, %v488
  %v490 = vpop.f32.mrb[0].mxu0
  %491 = vmatprep.mubr.f32.mxu0 0.0
  %492 = vmatmul.mubr.f32.gmra.mrb[0].mxu0 %v364
  %v493 = vpop.f32.mrb[0].mxu0
  %v494 = vadd.f32 %v343, %v493
  %v495 = vpop.f32.mrb[0].mxu0
  %496 = vmatprep.mubr.f32.mxu0 0.0
  %497 = vmatmul.mubr.f32.gmra.mrb[0].mxu0 %v367
  %v498 = vpop.f32.mrb[0].mxu0
  %v499 = vadd.f32 %v343, %v498
  %v500 = vpop.f32.mrb[0].mxu0
  %501 = vmatprep.mubr.f32.mxu0 0.0
  %502 = vmatmul.mubr.f32.gmra.mrb[0].mxu0 %v370
  %v503 = vpop.f32.mrb[0].mxu0
  %v504 = vadd.f32 %v343, %v503
  %v505 = vpop.f32.mrb[0].mxu0
  %506 = vmatprep.mubr.f32.mxu0 0.0
  %507 = vmatmul.mubr.f32.gmra.mrb[0].mxu0 %v373
  %v508 = vpop.f32.mrb[0].mxu0
  %v509 = vadd.f32 %v343, %v508
  %v510 = vpop.f32.mrb[0].mxu0
  %511 = vmatprep.mubr.f32.mxu0 0.0
  %512 = vmatmul.mubr.f32.gmra.mrb[0].mxu0 %v376
  %v513 = vpop.f32.mrb[0].mxu0
  %v514 = vadd.f32 %v343, %v513
  %v515 = vpop.f32.mrb[0].mxu0
  %516 = vmatprep.mubr.f32.mxu0 0.0
  %517 = vmatmul.mubr.f32.gmra.mrb[0].mxu0 %v379
  %v518 = vpop.f32.mrb[0].mxu0
  %v519 = vadd.f32 %v343, %v518
  %v520 = vpop.f32.mrb[0].mxu0
  %521 = vmatprep.mubr.f32.mxu0 0.0
  %522 = vmatmul.mubr.f32.gmra.mrb[0].mxu0 %v382
  %v523 = vpop.f32.mrb[0].mxu0
  %v524 = vadd.f32 %v343, %v523
  %v525 = vpop.f32.mrb[0].mxu0
  %526 = vmatprep.mubr.f32.mxu0 0.0
  %527 = vmatmul.mubr.f32.gmra.mrb[0].mxu0 %v385
  %v528 = vpop.f32.mrb[0].mxu0
  %v529 = vadd.f32 %v343, %v528
  %v530 = vpop.f32.mrb[0].mxu0
  %531 = vmatprep.mubr.f32.mxu0 0.0
  %532 = vmatmul.mubr.f32.gmra.mrb[0].mxu0 %v388
  %v533 = vpop.f32.mrb[0].mxu0
  %v534 = vadd.f32 %v343, %v533
  %v535 = vpop.f32.mrb[0].mxu0
  %536 = vmatprep.mubr.f32.mxu0 0.0
  %537 = vmatmul.mubr.f32.gmra.mrb[0].mxu0 %v391
  %v538 = vpop.f32.mrb[0].mxu0
  %v539 = vadd.f32 %v343, %v538
  %v540 = vpop.f32.mrb[0].mxu0
  %541 = vdwg.mxu0
  %v542 = vxor.u32 %v464, 2147483648
  %v543 = vxor.u32 %v469, 2147483648
  %v544 = vxor.u32 %v474, 2147483648
  %v545 = vxor.u32 %v479, 2147483648
  %v546 = vxor.u32 %v484, 2147483648
  %v547 = vxor.u32 %v489, 2147483648
  %v548 = vxor.u32 %v494, 2147483648
  %v549 = vxor.u32 %v499, 2147483648
  %v550 = vxor.u32 %v504, 2147483648
  %v551 = vxor.u32 %v509, 2147483648
  %v552 = vxor.u32 %v514, 2147483648
  %v553 = vxor.u32 %v519, 2147483648
  %v554 = vxor.u32 %v524, 2147483648
  %v555 = vxor.u32 %v529, 2147483648
  %v556 = vxor.u32 %v534, 2147483648
  %v557 = vxor.u32 %v539, 2147483648
  %v558 = vmul.f32 %v542, 1.442695
  %v559 = vpow.pop %v558
  %v560 = vmul.f32 %v543, 1.442695
  %v561 = vpow.pop %v560
  %v562 = vmul.f32 %v544, 1.442695
  %v563 = vpow.pop %v562
  %v564 = vmul.f32 %v545, 1.442695
  %v565 = vpow.pop %v564
  %v566 = vmul.f32 %v546, 1.442695
  %v567 = vpow.pop %v566
  %v568 = vmul.f32 %v547, 1.442695
  %v569 = vpow.pop %v568
  %v570 = vmul.f32 %v548, 1.442695
  %v571 = vpow.pop %v570
  %v572 = vmul.f32 %v549, 1.442695
  %v573 = vpow.pop %v572
  %v574 = vmul.f32 %v550, 1.442695
  %v575 = vpow.pop %v574
  %v576 = vmul.f32 %v551, 1.442695
  %v577 = vpow.pop %v576
  %v578 = vmul.f32 %v552, 1.442695
  %v579 = vpow.pop %v578
  %v580 = vmul.f32 %v553, 1.442695
  %v581 = vpow.pop %v580
  %v582 = vmul.f32 %v554, 1.442695
  %v583 = vpow.pop %v582
  %v584 = vmul.f32 %v555, 1.442695
  %v585 = vpow.pop %v584
  %v586 = vmul.f32 %v556, 1.442695
  %v587 = vpow.pop %v586
  %v588 = vmul.f32 %v557, 1.442695
  %v589 = vpow.pop %v588
  %v590 = vadd.f32 %v559, 1.0
  %v591 = vadd.f32 %v561, 1.0
  %v592 = vadd.f32 %v563, 1.0
  %v593 = vadd.f32 %v565, 1.0
  %v594 = vadd.f32 %v567, 1.0
  %v595 = vadd.f32 %v569, 1.0
  %v596 = vadd.f32 %v571, 1.0
  %v597 = vadd.f32 %v573, 1.0
  %v598 = vadd.f32 %v575, 1.0
  %v599 = vadd.f32 %v577, 1.0
  %v600 = vadd.f32 %v579, 1.0
  %v601 = vadd.f32 %v581, 1.0
  %v602 = vadd.f32 %v583, 1.0
  %v603 = vadd.f32 %v585, 1.0
  %v604 = vadd.f32 %v587, 1.0
  %v605 = vadd.f32 %v589, 1.0
  %v606 = vrcp.pop %v590
  %v607 = vmul.f32 1.0, %v606
  %v608 = vrcp.pop %v591
  %v609 = vmul.f32 1.0, %v608
  %v610 = vrcp.pop %v592
  %v611 = vmul.f32 1.0, %v610
  %v612 = vrcp.pop %v593
  %v613 = vmul.f32 1.0, %v612
  %v614 = vrcp.pop %v594
  %v615 = vmul.f32 1.0, %v614
  %v616 = vrcp.pop %v595
  %v617 = vmul.f32 1.0, %v616
  %v618 = vrcp.pop %v596
  %v619 = vmul.f32 1.0, %v618
  %v620 = vrcp.pop %v597
  %v621 = vmul.f32 1.0, %v620
  %v622 = vrcp.pop %v598
  %v623 = vmul.f32 1.0, %v622
  %v624 = vrcp.pop %v599
  %v625 = vmul.f32 1.0, %v624
  %v626 = vrcp.pop %v600
  %v627 = vmul.f32 1.0, %v626
  %v628 = vrcp.pop %v601
  %v629 = vmul.f32 1.0, %v628
  %v630 = vrcp.pop %v602
  %v631 = vmul.f32 1.0, %v630
  %v632 = vrcp.pop %v603
  %v633 = vmul.f32 1.0, %v632
  %v634 = vrcp.pop %v604
  %v635 = vmul.f32 1.0, %v634
  %v636 = vrcp.pop %v605
  %v637 = vmul.f32 1.0, %v636
  %v638 = vld [vmem:[%s3] sm:$0xff]
  %v639 = vld [vmem:[%s3 + $0x8] sm:$0xff]
  %v640 = vld [vmem:[%s3 + $0x10] sm:$0xff]
  %v641 = vld [vmem:[%s3 + $0x18] sm:$0x3f]
  %v643 = vsel %vm344, %v607, 0
  %v646 = vsel %vm344, %v609, 0
  %v649 = vsel %vm344, %v611, 0
  %v652 = vsel %vm344, %v613, 0
  %v655 = vsel %vm344, %v615, 0
  %v658 = vsel %vm344, %v617, 0
  %v661 = vsel %vm344, %v619, 0
  %v664 = vsel %vm344, %v621, 0
  %v667 = vsel %vm344, %v623, 0
  %v670 = vsel %vm344, %v625, 0
  %v673 = vsel %vm344, %v627, 0
  %v676 = vsel %vm344, %v629, 0
  %v679 = vsel %vm344, %v631, 0
  %v682 = vsel %vm344, %v633, 0
  %v685 = vsel %vm344, %v635, 0
  %v688 = vsel %vm344, %v637, 0
  %v691 = vsel %vm393, %v641, 0
  %693 = vmatprep.subr.mxu0 0.0
  %694 = vmatpush1.msra.mxu0 %v638
  %695 = vmatprep.subr.mxu0 0.0
  %696 = vmatpush1.msra.mxu0 %v639
  %697 = vmatprep.subr.mxu0 0.0
  %698 = vmatpush1.msra.mxu0 %v640
  %699 = vmatprep.subr.mxu0 0.0
  %700 = vmatpush1.msra.mxu0 %v691
  %701 = vmatprep.subr.mxu0 0.0
  %702 = vmatpush1.msra.mxu0 0.0
  %703 = vmatprep.subr.mxu0 0.0
  %704 = vmatpush1.msra.mxu0 0.0
  %705 = vmatprep.subr.mxu0 0.0
  %706 = vmatpush1.msra.mxu0 0.0
  %707 = vmatprep.subr.mxu0 0.0
  %708 = vmatpush1.msra.mxu0 0.0
  %709 = vmatprep.subr.mxu0 0.0
  %710 = vmatpush1.msra.mxu0 0.0
  %711 = vmatprep.subr.mxu0 0.0
  %712 = vmatpush1.msra.mxu0 0.0
  %713 = vmatprep.subr.mxu0 0.0
  %714 = vmatpush1.msra.mxu0 0.0
  %715 = vmatprep.subr.mxu0 0.0
  %716 = vmatpush1.msra.mxu0 0.0
  %717 = vmatprep.subr.mxu0 0.0
  %718 = vmatpush1.msra.mxu0 0.0
  %719 = vmatprep.subr.mxu0 0.0
  %720 = vmatpush1.msra.mxu0 0.0
  %721 = vmatprep.subr.mxu0 0.0
  %722 = vmatpush1.msra.mxu0 0.0
  %723 = vmatprep.subr.mxu0 0.0
  %724 = vmatpush1.msra.mxu0 0.0
  %725 = vmatprep.subr.mxu0 0.0
  %726 = vmatpush1.msra.mxu0 0.0
  %727 = vmatprep.subr.mxu0 0.0
  %728 = vmatpush1.msra.mxu0 0.0
  %729 = vmatprep.subr.mxu0 0.0
  %730 = vmatpush1.msra.mxu0 0.0
  %731 = vmatprep.subr.mxu0 0.0
  %732 = vmatpush1.msra.mxu0 0.0
  %733 = vmatprep.subr.mxu0 0.0
  %734 = vmatpush1.msra.mxu0 0.0
  %735 = vmatprep.subr.mxu0 0.0
  %736 = vmatpush1.msra.mxu0 0.0
  %737 = vmatprep.subr.mxu0 0.0
  %738 = vmatpush1.msra.mxu0 0.0
  %739 = vmatprep.subr.mxu0 0.0
  %740 = vmatpush1.msra.mxu0 0.0
  %741 = vmatprep.subr.mxu0 0.0
  %742 = vmatpush1.msra.mxu0 0.0
  %743 = vmatprep.subr.mxu0 0.0
  %744 = vmatpush1.msra.mxu0 0.0
  %745 = vmatprep.subr.mxu0 0.0
  %746 = vmatpush1.msra.mxu0 0.0
  %747 = vmatprep.subr.mxu0 0.0
  %748 = vmatpush1.msra.mxu0 0.0
  %749 = vmatprep.subr.mxu0 0.0
  %750 = vmatpush1.msra.mxu0 0.0
  %751 = vmatprep.subr.mxu0 0.0
  %752 = vmatpush1.msra.mxu0 0.0
  %753 = vmatprep.subr.mxu0 0.0
  %754 = vmatpush1.msra.mxu0 0.0
  %755 = vmatprep.subr.mxu0 0.0
  %756 = vmatpush1.msra.mxu0 0.0
  %757 = vmatprep.mubr.f32.mxu0 0.0
  %758 = vmatmul.mubr.f32.gmra.mrb[0].mxu0 %v643
  %v759 = vpop.f32.mrb[0].mxu0
  %v760 = vadd.f32 0.0, %v759
  %v761 = vpop.f32.mrb[0].mxu0
  %762 = vmatprep.mubr.f32.mxu0 0.0
  %763 = vmatmul.mubr.f32.gmra.mrb[0].mxu0 %v646
  %v764 = vpop.f32.mrb[0].mxu0
  %v765 = vadd.f32 0.0, %v764
  %v766 = vpop.f32.mrb[0].mxu0
  %767 = vmatprep.mubr.f32.mxu0 0.0
  %768 = vmatmul.mubr.f32.gmra.mrb[0].mxu0 %v649
  %v769 = vpop.f32.mrb[0].mxu0
  %v770 = vadd.f32 0.0, %v769
  %v771 = vpop.f32.mrb[0].mxu0
  %772 = vmatprep.mubr.f32.mxu0 0.0
  %773 = vmatmul.mubr.f32.gmra.mrb[0].mxu0 %v652
  %v774 = vpop.f32.mrb[0].mxu0
  %v775 = vadd.f32 0.0, %v774
  %v776 = vpop.f32.mrb[0].mxu0
  %777 = vmatprep.mubr.f32.mxu0 0.0
  %778 = vmatmul.mubr.f32.gmra.mrb[0].mxu0 %v655
  %v779 = vpop.f32.mrb[0].mxu0
  %v780 = vadd.f32 0.0, %v779
  %v781 = vpop.f32.mrb[0].mxu0
  %782 = vmatprep.mubr.f32.mxu0 0.0
  %783 = vmatmul.mubr.f32.gmra.mrb[0].mxu0 %v658
  %v784 = vpop.f32.mrb[0].mxu0
  %v785 = vadd.f32 0.0, %v784
  %v786 = vpop.f32.mrb[0].mxu0
  %787 = vmatprep.mubr.f32.mxu0 0.0
  %788 = vmatmul.mubr.f32.gmra.mrb[0].mxu0 %v661
  %v789 = vpop.f32.mrb[0].mxu0
  %v790 = vadd.f32 0.0, %v789
  %v791 = vpop.f32.mrb[0].mxu0
  %792 = vmatprep.mubr.f32.mxu0 0.0
  %793 = vmatmul.mubr.f32.gmra.mrb[0].mxu0 %v664
  %v794 = vpop.f32.mrb[0].mxu0
  %v795 = vadd.f32 0.0, %v794
  %v796 = vpop.f32.mrb[0].mxu0
  %797 = vmatprep.mubr.f32.mxu0 0.0
  %798 = vmatmul.mubr.f32.gmra.mrb[0].mxu0 %v667
  %v799 = vpop.f32.mrb[0].mxu0
  %v800 = vadd.f32 0.0, %v799
  %v801 = vpop.f32.mrb[0].mxu0
  %802 = vmatprep.mubr.f32.mxu0 0.0
  %803 = vmatmul.mubr.f32.gmra.mrb[0].mxu0 %v670
  %v804 = vpop.f32.mrb[0].mxu0
  %v805 = vadd.f32 0.0, %v804
  %v806 = vpop.f32.mrb[0].mxu0
  %807 = vmatprep.mubr.f32.mxu0 0.0
  %808 = vmatmul.mubr.f32.gmra.mrb[0].mxu0 %v673
  %v809 = vpop.f32.mrb[0].mxu0
  %v810 = vadd.f32 0.0, %v809
  %v811 = vpop.f32.mrb[0].mxu0
  %812 = vmatprep.mubr.f32.mxu0 0.0
  %813 = vmatmul.mubr.f32.gmra.mrb[0].mxu0 %v676
  %v814 = vpop.f32.mrb[0].mxu0
  %v815 = vadd.f32 0.0, %v814
  %v816 = vpop.f32.mrb[0].mxu0
  %817 = vmatprep.mubr.f32.mxu0 0.0
  %818 = vmatmul.mubr.f32.gmra.mrb[0].mxu0 %v679
  %v819 = vpop.f32.mrb[0].mxu0
  %v820 = vadd.f32 0.0, %v819
  %v821 = vpop.f32.mrb[0].mxu0
  %822 = vmatprep.mubr.f32.mxu0 0.0
  %823 = vmatmul.mubr.f32.gmra.mrb[0].mxu0 %v682
  %v824 = vpop.f32.mrb[0].mxu0
  %v825 = vadd.f32 0.0, %v824
  %v826 = vpop.f32.mrb[0].mxu0
  %827 = vmatprep.mubr.f32.mxu0 0.0
  %828 = vmatmul.mubr.f32.gmra.mrb[0].mxu0 %v685
  %v829 = vpop.f32.mrb[0].mxu0
  %v830 = vadd.f32 0.0, %v829
  %v831 = vpop.f32.mrb[0].mxu0
  %832 = vmatprep.mubr.f32.mxu0 0.0
  %833 = vmatmul.mubr.f32.gmra.mrb[0].mxu0 %v688
  %v834 = vpop.f32.mrb[0].mxu0
  %v835 = vadd.f32 0.0, %v834
  %v836 = vpop.f32.mrb[0].mxu0
  %837 = vdwg.mxu0
  %vm838 = vcmask 64512
  %v839 = vsel %vm838, %v760, -inf
  %840 = vmax.xlane.f32.xlu0 %v839
  %v841 = vpop.xlane.xlu0 %840
  %v842 = vsel %vm838, %v765, -inf
  %843 = vmax.xlane.f32.xlu0 %v842
  %v844 = vpop.xlane.xlu0 %843
  %v845 = vsel %vm838, %v770, -inf
  %846 = vmax.xlane.f32.xlu0 %v845
  %v847 = vpop.xlane.xlu0 %846
  %v848 = vsel %vm838, %v775, -inf
  %849 = vmax.xlane.f32.xlu0 %v848
  %v850 = vpop.xlane.xlu0 %849
  %v851 = vsel %vm838, %v780, -inf
  %852 = vmax.xlane.f32.xlu0 %v851
  %v853 = vpop.xlane.xlu0 %852
  %v854 = vsel %vm838, %v785, -inf
  %855 = vmax.xlane.f32.xlu0 %v854
  %v856 = vpop.xlane.xlu0 %855
  %v857 = vsel %vm838, %v790, -inf
  %858 = vmax.xlane.f32.xlu0 %v857
  %v859 = vpop.xlane.xlu0 %858
  %v860 = vsel %vm838, %v795, -inf
  %861 = vmax.xlane.f32.xlu0 %v860
  %v862 = vpop.xlane.xlu0 %861
  %v863 = vsel %vm838, %v800, -inf
  %864 = vmax.xlane.f32.xlu0 %v863
  %v865 = vpop.xlane.xlu0 %864
  %v866 = vsel %vm838, %v805, -inf
  %867 = vmax.xlane.f32.xlu0 %v866
  %v868 = vpop.xlane.xlu0 %867
  %v869 = vsel %vm838, %v810, -inf
  %870 = vmax.xlane.f32.xlu0 %v869
  %v871 = vpop.xlane.xlu0 %870
  %v872 = vsel %vm838, %v815, -inf
  %873 = vmax.xlane.f32.xlu0 %v872
  %v874 = vpop.xlane.xlu0 %873
  %v875 = vsel %vm838, %v820, -inf
  %876 = vmax.xlane.f32.xlu0 %v875
  %v877 = vpop.xlane.xlu0 %876
  %v878 = vsel %vm838, %v825, -inf
  %879 = vmax.xlane.f32.xlu0 %v878
  %v880 = vpop.xlane.xlu0 %879
  %v881 = vsel %vm838, %v830, -inf
  %882 = vmax.xlane.f32.xlu0 %v881
  %v883 = vpop.xlane.xlu0 %882
  %v884 = vsel %vm838, %v835, -inf
  %885 = vmax.xlane.f32.xlu0 %v884
  %v886 = vpop.xlane.xlu0 %885
  %v887 = vsub.f32 %v760, %v841
  %v888 = vsub.f32 %v765, %v844
  %v889 = vsub.f32 %v770, %v847
  %v890 = vsub.f32 %v775, %v850
  %v891 = vsub.f32 %v780, %v853
  %v892 = vsub.f32 %v785, %v856
  %v893 = vsub.f32 %v790, %v859
  %v894 = vsub.f32 %v795, %v862
  %v895 = vsub.f32 %v800, %v865
  %v896 = vsub.f32 %v805, %v868
  %v897 = vsub.f32 %v810, %v871
  %v898 = vsub.f32 %v815, %v874
  %v899 = vsub.f32 %v820, %v877
  %v900 = vsub.f32 %v825, %v880
  %v901 = vsub.f32 %v830, %v883
  %v902 = vsub.f32 %v835, %v886
  %v903 = vmul.f32 %v887, 1.442695
  %v904 = vpow.pop %v903
  %v905 = vmul.f32 %v888, 1.442695
  %v906 = vpow.pop %v905
  %v907 = vmul.f32 %v889, 1.442695
  %v908 = vpow.pop %v907
  %v909 = vmul.f32 %v890, 1.442695
  %v910 = vpow.pop %v909
  %v911 = vmul.f32 %v891, 1.442695
  %v912 = vpow.pop %v911
  %v913 = vmul.f32 %v892, 1.442695
  %v914 = vpow.pop %v913
  %v915 = vmul.f32 %v893, 1.442695
  %v916 = vpow.pop %v915
  %v917 = vmul.f32 %v894, 1.442695
  %v918 = vpow.pop %v917
  %v919 = vmul.f32 %v895, 1.442695
  %v920 = vpow.pop %v919
  %v921 = vmul.f32 %v896, 1.442695
  %v922 = vpow.pop %v921
  %v923 = vmul.f32 %v897, 1.442695
  %v924 = vpow.pop %v923
  %v925 = vmul.f32 %v898, 1.442695
  %v926 = vpow.pop %v925
  %v927 = vmul.f32 %v899, 1.442695
  %v928 = vpow.pop %v927
  %v929 = vmul.f32 %v900, 1.442695
  %v930 = vpow.pop %v929
  %v931 = vmul.f32 %v901, 1.442695
  %v932 = vpow.pop %v931
  %v933 = vmul.f32 %v902, 1.442695
  %v934 = vpow.pop %v933
  %v935 = vsel %vm838, %v904, 0.0
  %936 = vadd.xlane.f32.xlu0 %v935
  %v937 = vpop.xlane.xlu0 %936
  %v938 = vsel %vm838, %v906, 0.0
  %939 = vadd.xlane.f32.xlu0 %v938
  %v940 = vpop.xlane.xlu0 %939
  %v941 = vsel %vm838, %v908, 0.0
  %942 = vadd.xlane.f32.xlu0 %v941
  %v943 = vpop.xlane.xlu0 %942
  %v944 = vsel %vm838, %v910, 0.0
  %945 = vadd.xlane.f32.xlu0 %v944
  %v946 = vpop.xlane.xlu0 %945
  %v947 = vsel %vm838, %v912, 0.0
  %948 = vadd.xlane.f32.xlu0 %v947
  %v949 = vpop.xlane.xlu0 %948
  %v950 = vsel %vm838, %v914, 0.0
  %951 = vadd.xlane.f32.xlu0 %v950
  %v952 = vpop.xlane.xlu0 %951
  %v953 = vsel %vm838, %v916, 0.0
  %954 = vadd.xlane.f32.xlu0 %v953
  %v955 = vpop.xlane.xlu0 %954
  %v956 = vsel %vm838, %v918, 0.0
  %957 = vadd.xlane.f32.xlu0 %v956
  %v958 = vpop.xlane.xlu0 %957
  %v959 = vsel %vm838, %v920, 0.0
  %960 = vadd.xlane.f32.xlu0 %v959
  %v961 = vpop.xlane.xlu0 %960
  %v962 = vsel %vm838, %v922, 0.0
  %963 = vadd.xlane.f32.xlu0 %v962
  %v964 = vpop.xlane.xlu0 %963
  %v965 = vsel %vm838, %v924, 0.0
  %966 = vadd.xlane.f32.xlu0 %v965
  %v967 = vpop.xlane.xlu0 %966
  %v968 = vsel %vm838, %v926, 0.0
  %969 = vadd.xlane.f32.xlu0 %v968
  %v970 = vpop.xlane.xlu0 %969
  %v971 = vsel %vm838, %v928, 0.0
  %972 = vadd.xlane.f32.xlu0 %v971
  %v973 = vpop.xlane.xlu0 %972
  %v974 = vsel %vm838, %v930, 0.0
  %975 = vadd.xlane.f32.xlu0 %v974
  %v976 = vpop.xlane.xlu0 %975
  %v977 = vsel %vm838, %v932, 0.0
  %978 = vadd.xlane.f32.xlu0 %v977
  %v979 = vpop.xlane.xlu0 %978
  %v980 = vsel %vm838, %v934, 0.0
  %981 = vadd.xlane.f32.xlu0 %v980
  %v982 = vpop.xlane.xlu0 %981
  %v983 = vrcp.pop %v937
  %v984 = vmul.f32 %v904, %v983
  %v985 = vrcp.pop %v940
  %v986 = vmul.f32 %v906, %v985
  %v987 = vrcp.pop %v943
  %v988 = vmul.f32 %v908, %v987
  %v989 = vrcp.pop %v946
  %v990 = vmul.f32 %v910, %v989
  %v991 = vrcp.pop %v949
  %v992 = vmul.f32 %v912, %v991
  %v993 = vrcp.pop %v952
  %v994 = vmul.f32 %v914, %v993
  %v995 = vrcp.pop %v955
  %v996 = vmul.f32 %v916, %v995
  %v997 = vrcp.pop %v958
  %v998 = vmul.f32 %v918, %v997
  %v999 = vrcp.pop %v961
  %v1000 = vmul.f32 %v920, %v999
  %v1001 = vrcp.pop %v964
  %v1002 = vmul.f32 %v922, %v1001
  %v1003 = vrcp.pop %v967
  %v1004 = vmul.f32 %v924, %v1003
  %v1005 = vrcp.pop %v970
  %v1006 = vmul.f32 %v926, %v1005
  %v1007 = vrcp.pop %v973
  %v1008 = vmul.f32 %v928, %v1007
  %v1009 = vrcp.pop %v976
  %v1010 = vmul.f32 %v930, %v1009
  %v1011 = vrcp.pop %v979
  %v1012 = vmul.f32 %v932, %v1011
  %v1013 = vrcp.pop %v982
  %v1014 = vmul.f32 %v934, %v1013
  %v1015 = vlaneseq
  %v1016 = vshrl.u32 %v1015, 7
  %v1017 = vsub.s32 0, %v1016
  %v1018 = vrot.slane %v38, %v1017
  %v1019 = vmul.f32 %v984, %v1018
  %v1020 = vmul.f32 %v986, %v1018
  %v1021 = vmul.f32 %v988, %v1018
  %v1022 = vmul.f32 %v990, %v1018
  %v1023 = vmul.f32 %v992, %v1018
  %v1024 = vmul.f32 %v994, %v1018
  %v1025 = vmul.f32 %v996, %v1018
  %v1026 = vmul.f32 %v998, %v1018
  %v1027 = vmul.f32 %v1000, %v1018
  %v1028 = vmul.f32 %v1002, %v1018
  %v1029 = vmul.f32 %v1004, %v1018
  %v1030 = vmul.f32 %v1006, %v1018
  %v1031 = vmul.f32 %v1008, %v1018
  %v1032 = vmul.f32 %v1010, %v1018
  %v1033 = vmul.f32 %v1012, %v1018
  %v1034 = vmul.f32 %v1014, %v1018
  %v1035 = vlaneseq
  %v1036 = vshrl.u32 %v1035, 7
  %v1037 = vsub.s32 0, %v1036
  %v1038 = vrot.slane %v39, %v1037
  %v1039 = vadd.f32 %v1019, %v1038
  %v1040 = vadd.f32 %v1020, %v1038
  %v1041 = vadd.f32 %v1021, %v1038
  %v1042 = vadd.f32 %v1022, %v1038
  %v1043 = vadd.f32 %v1023, %v1038
  %v1044 = vadd.f32 %v1024, %v1038
  %v1045 = vadd.f32 %v1025, %v1038
  %v1046 = vadd.f32 %v1026, %v1038
  %v1047 = vadd.f32 %v1027, %v1038
  %v1048 = vadd.f32 %v1028, %v1038
  %v1049 = vadd.f32 %v1029, %v1038
  %v1050 = vadd.f32 %v1030, %v1038
  %v1051 = vadd.f32 %v1031, %v1038
  %v1052 = vadd.f32 %v1032, %v1038
  %v1053 = vadd.f32 %v1033, %v1038
  %v1054 = vadd.f32 %v1034, %v1038
  %v1055 = vmax.f32 %v1039, 0.0
  %v1056 = vmax.f32 %v1040, 0.0
  %v1057 = vmax.f32 %v1041, 0.0
  %v1058 = vmax.f32 %v1042, 0.0
  %v1059 = vmax.f32 %v1043, 0.0
  %v1060 = vmax.f32 %v1044, 0.0
  %v1061 = vmax.f32 %v1045, 0.0
  %v1062 = vmax.f32 %v1046, 0.0
  %v1063 = vmax.f32 %v1047, 0.0
  %v1064 = vmax.f32 %v1048, 0.0
  %v1065 = vmax.f32 %v1049, 0.0
  %v1066 = vmax.f32 %v1050, 0.0
  %v1067 = vmax.f32 %v1051, 0.0
  %v1068 = vmax.f32 %v1052, 0.0
  %v1069 = vmax.f32 %v1053, 0.0
  %v1070 = vmax.f32 %v1054, 0.0
  %v1071 = vsel %vm838, %v1055, 0.0
  %1072 = vadd.xlane.f32.xlu0 %v1071
  %v1073 = vpop.xlane.xlu0 %1072
  %v1074 = vsel %vm838, %v1056, 0.0
  %1075 = vadd.xlane.f32.xlu0 %v1074
  %v1076 = vpop.xlane.xlu0 %1075
  %v1077 = vsel %vm838, %v1057, 0.0
  %1078 = vadd.xlane.f32.xlu0 %v1077
  %v1079 = vpop.xlane.xlu0 %1078
  %v1080 = vsel %vm838, %v1058, 0.0
  %1081 = vadd.xlane.f32.xlu0 %v1080
  %v1082 = vpop.xlane.xlu0 %1081
  %v1083 = vsel %vm838, %v1059, 0.0
  %1084 = vadd.xlane.f32.xlu0 %v1083
  %v1085 = vpop.xlane.xlu0 %1084
  %v1086 = vsel %vm838, %v1060, 0.0
  %1087 = vadd.xlane.f32.xlu0 %v1086
  %v1088 = vpop.xlane.xlu0 %1087
  %v1089 = vsel %vm838, %v1061, 0.0
  %1090 = vadd.xlane.f32.xlu0 %v1089
  %v1091 = vpop.xlane.xlu0 %1090
  %v1092 = vsel %vm838, %v1062, 0.0
  %1093 = vadd.xlane.f32.xlu0 %v1092
  %v1094 = vpop.xlane.xlu0 %1093
  %v1095 = vsel %vm838, %v1063, 0.0
  %1096 = vadd.xlane.f32.xlu0 %v1095
  %v1097 = vpop.xlane.xlu0 %1096
  %v1098 = vsel %vm838, %v1064, 0.0
  %1099 = vadd.xlane.f32.xlu0 %v1098
  %v1100 = vpop.xlane.xlu0 %1099
  %v1101 = vsel %vm838, %v1065, 0.0
  %1102 = vadd.xlane.f32.xlu0 %v1101
  %v1103 = vpop.xlane.xlu0 %1102
  %v1104 = vsel %vm838, %v1066, 0.0
  %1105 = vadd.xlane.f32.xlu0 %v1104
  %v1106 = vpop.xlane.xlu0 %1105
  %v1107 = vsel %vm838, %v1067, 0.0
  %1108 = vadd.xlane.f32.xlu0 %v1107
  %v1109 = vpop.xlane.xlu0 %1108
  %v1110 = vsel %vm838, %v1068, 0.0
  %1111 = vadd.xlane.f32.xlu0 %v1110
  %v1112 = vpop.xlane.xlu0 %1111
  %v1113 = vsel %vm838, %v1069, 0.0
  %1114 = vadd.xlane.f32.xlu0 %v1113
  %v1115 = vpop.xlane.xlu0 %1114
  %v1116 = vsel %vm838, %v1070, 0.0
  %1117 = vadd.xlane.f32.xlu0 %v1116
  %v1118 = vpop.xlane.xlu0 %1117
  %v1119 = vrcp.pop %v1073
  %v1120 = vrcp.pop %v1076
  %v1121 = vrcp.pop %v1079
  %v1122 = vrcp.pop %v1082
  %v1123 = vrcp.pop %v1085
  %v1124 = vrcp.pop %v1088
  %v1125 = vrcp.pop %v1091
  %v1126 = vrcp.pop %v1094
  %v1127 = vrcp.pop %v1097
  %v1128 = vrcp.pop %v1100
  %v1129 = vrcp.pop %v1103
  %v1130 = vrcp.pop %v1106
  %v1131 = vrcp.pop %v1109
  %v1132 = vrcp.pop %v1112
  %v1133 = vrcp.pop %v1115
  %v1134 = vrcp.pop %v1118
  %v1135 = vmul.f32 %v1055, %v1119
  %v1136 = vmul.f32 %v1056, %v1120
  %v1137 = vmul.f32 %v1057, %v1121
  %v1138 = vmul.f32 %v1058, %v1122
  %v1139 = vmul.f32 %v1059, %v1123
  %v1140 = vmul.f32 %v1060, %v1124
  %v1141 = vmul.f32 %v1061, %v1125
  %v1142 = vmul.f32 %v1062, %v1126
  %v1143 = vmul.f32 %v1063, %v1127
  %v1144 = vmul.f32 %v1064, %v1128
  %v1145 = vmul.f32 %v1065, %v1129
  %v1146 = vmul.f32 %v1066, %v1130
  %v1147 = vmul.f32 %v1067, %v1131
  %v1148 = vmul.f32 %v1068, %v1132
  %v1149 = vmul.f32 %v1069, %v1133
  %v1150 = vmul.f32 %v1070, %v1134
  %v1151 = vsel %vm838, %v1135, 0.0
  %1152 = vadd.xlane.f32.xlu0 %v1151
  %v1153 = vpop.xlane.xlu0 %1152
  %v1154 = vsel %vm838, %v1136, 0.0
  %1155 = vadd.xlane.f32.xlu0 %v1154
  %v1156 = vpop.xlane.xlu0 %1155
  %v1157 = vsel %vm838, %v1137, 0.0
  %1158 = vadd.xlane.f32.xlu0 %v1157
  %v1159 = vpop.xlane.xlu0 %1158
  %v1160 = vsel %vm838, %v1138, 0.0
  %1161 = vadd.xlane.f32.xlu0 %v1160
  %v1162 = vpop.xlane.xlu0 %1161
  %v1163 = vsel %vm838, %v1139, 0.0
  %1164 = vadd.xlane.f32.xlu0 %v1163
  %v1165 = vpop.xlane.xlu0 %1164
  %v1166 = vsel %vm838, %v1140, 0.0
  %1167 = vadd.xlane.f32.xlu0 %v1166
  %v1168 = vpop.xlane.xlu0 %1167
  %v1169 = vsel %vm838, %v1141, 0.0
  %1170 = vadd.xlane.f32.xlu0 %v1169
  %v1171 = vpop.xlane.xlu0 %1170
  %v1172 = vsel %vm838, %v1142, 0.0
  %1173 = vadd.xlane.f32.xlu0 %v1172
  %v1174 = vpop.xlane.xlu0 %1173
  %v1175 = vsel %vm838, %v1143, 0.0
  %1176 = vadd.xlane.f32.xlu0 %v1175
  %v1177 = vpop.xlane.xlu0 %1176
  %v1178 = vsel %vm838, %v1144, 0.0
  %1179 = vadd.xlane.f32.xlu0 %v1178
  %v1180 = vpop.xlane.xlu0 %1179
  %v1181 = vsel %vm838, %v1145, 0.0
  %1182 = vadd.xlane.f32.xlu0 %v1181
  %v1183 = vpop.xlane.xlu0 %1182
  %v1184 = vsel %vm838, %v1146, 0.0
  %1185 = vadd.xlane.f32.xlu0 %v1184
  %v1186 = vpop.xlane.xlu0 %1185
  %v1187 = vsel %vm838, %v1147, 0.0
  %1188 = vadd.xlane.f32.xlu0 %v1187
  %v1189 = vpop.xlane.xlu0 %1188
  %v1190 = vsel %vm838, %v1148, 0.0
  %1191 = vadd.xlane.f32.xlu0 %v1190
  %v1192 = vpop.xlane.xlu0 %1191
  %v1193 = vsel %vm838, %v1149, 0.0
  %1194 = vadd.xlane.f32.xlu0 %v1193
  %v1195 = vpop.xlane.xlu0 %1194
  %v1196 = vsel %vm838, %v1150, 0.0
  %1197 = vadd.xlane.f32.xlu0 %v1196
  %v1198 = vpop.xlane.xlu0 %1197
  %v1199 = vrcp.pop %v1153
  %v1200 = vrcp.pop %v1156
  %v1201 = vrcp.pop %v1159
  %v1202 = vrcp.pop %v1162
  %v1203 = vrcp.pop %v1165
  %v1204 = vrcp.pop %v1168
  %v1205 = vrcp.pop %v1171
  %v1206 = vrcp.pop %v1174
  %v1207 = vrcp.pop %v1177
  %v1208 = vrcp.pop %v1180
  %v1209 = vrcp.pop %v1183
  %v1210 = vrcp.pop %v1186
  %v1211 = vrcp.pop %v1189
  %v1212 = vrcp.pop %v1192
  %v1213 = vrcp.pop %v1195
  %v1214 = vrcp.pop %v1198
  %v1215 = vmul.f32 %v1135, %v1199
  %v1216 = vmul.f32 %v1136, %v1200
  %v1217 = vmul.f32 %v1137, %v1201
  %v1218 = vmul.f32 %v1138, %v1202
  %v1219 = vmul.f32 %v1139, %v1203
  %v1220 = vmul.f32 %v1140, %v1204
  %v1221 = vmul.f32 %v1141, %v1205
  %v1222 = vmul.f32 %v1142, %v1206
  %v1223 = vmul.f32 %v1143, %v1207
  %v1224 = vmul.f32 %v1144, %v1208
  %v1225 = vmul.f32 %v1145, %v1209
  %v1226 = vmul.f32 %v1146, %v1210
  %v1227 = vmul.f32 %v1147, %v1211
  %v1228 = vmul.f32 %v1148, %v1212
  %v1229 = vmul.f32 %v1149, %v1213
  %v1230 = vmul.f32 %v1150, %v1214
  %1231 = vst.msk [vmem:[%s5] sm:$0xff] %vm838, %v1215
  %1232 = vst.msk [vmem:[%s5 + $0x8] sm:$0xff] %vm838, %v1216
  %1233 = vst.msk [vmem:[%s5 + $0x10] sm:$0xff] %vm838, %v1217
  %1234 = vst.msk [vmem:[%s5 + $0x18] sm:$0xff] %vm838, %v1218
  %1235 = vst.msk [vmem:[%s5 + $0x20] sm:$0xff] %vm838, %v1219
  %1236 = vst.msk [vmem:[%s5 + $0x28] sm:$0xff] %vm838, %v1220
  %1237 = vst.msk [vmem:[%s5 + $0x30] sm:$0xff] %vm838, %v1221
  %1238 = vst.msk [vmem:[%s5 + $0x38] sm:$0xff] %vm838, %v1222
  %1239 = vst.msk [vmem:[%s5 + $0x40] sm:$0xff] %vm838, %v1223
  %1240 = vst.msk [vmem:[%s5 + $0x48] sm:$0xff] %vm838, %v1224
  %1241 = vst.msk [vmem:[%s5 + $0x50] sm:$0xff] %vm838, %v1225
  %1242 = vst.msk [vmem:[%s5 + $0x58] sm:$0xff] %vm838, %v1226
  %1243 = vst.msk [vmem:[%s5 + $0x60] sm:$0xff] %vm838, %v1227
  %1244 = vst.msk [vmem:[%s5 + $0x68] sm:$0xff] %vm838, %v1228
  %1245 = vst.msk [vmem:[%s5 + $0x70] sm:$0xff] %vm838, %v1229
  %1246 = vst.msk [vmem:[%s5 + $0x78] sm:$0xff] %vm838, %v1230
  // Predicated region
  $region22: #{tpu_custom_call.1} parent=0 // pred_check
    _
  $region23: #{tpu_custom_call.1} parent=0 // pred_check_branch
    %1248 = sbr.rel (0) target = $region25
  $region24: #{tpu_custom_call.1} parent=0 // pred_region
    _
  $region25: #{tpu_custom_call.1} parent=0 // pred_fallthru
    _
  // Predicated region
  $region26: #{tpu_custom_call.1} parent=0 // pred_check
    _
  $region27: #{tpu_custom_call.1} parent=0 // pred_check_branch
    %1250 = sbr.rel (0) target = $region29
  $region28: #{tpu_custom_call.1} parent=0 // pred_region
    _
  $region29: #{tpu_custom_call.1} parent=0 // pred_fallthru
    _

</llo_original>
